<compile_context>
chip_gen: v5e
topology: v5e:2x2
jax: 0.10.0
libtpu: 0.0.40
codegen_flags: <defaults>
</compile_context>

<pallas_src>
import jax
import jax.numpy as jnp
from jax.experimental import pallas as pl
from jax.experimental.pallas import tpu as pltpu


def simple_model_kernel(xt_ref, w1_ref, b1_ref, w2_ref, b2_ref, ot_ref):
    # layer1, canonical MXU form:  W1[hidden, in] @ x^T[in, B] -> h^T[hidden, B]
    h = jnp.dot(w1_ref[...], xt_ref[...], preferred_element_type=jnp.float32)
    # bias [hidden, 1] broadcasts across the lane (batch) axis; ReLU on VPU.
    h = jnp.maximum(h + b1_ref[...], 0.0)
    # layer2:  W2[out, hidden] @ h^T[hidden, B] -> out^T[out, B]  (lane-dense)
    o = jnp.dot(w2_ref[...], h, preferred_element_type=jnp.float32)
    ot_ref[...] = (o + b2_ref[...]).astype(ot_ref.dtype)


def prepare_params(w1, b1, w2, b2):
    """One-time parameter prep (zero per-forward cost).

    Weights stay exactly in PyTorch [out, in] / [out, hidden] layout -- the
    feature-major kernel consumes them in canonical MXU orientation, so no
    transpose is ever materialized.  Biases become column vectors [F, 1] that
    broadcast over the lane (batch) axis inside the kernel.
    """
    return w1, b1.reshape(-1, 1), w2, b2.reshape(-1, 1)


def simple_model_forward(x, w1, b1_col, w2, b2_col, *,
                         batch_tile=8192, single_block_max_b=32768):
    """x: [B, in]; w1: [hidden, in] (PyTorch layout); b1_col: [hidden, 1];
       w2: [out, hidden]; b2_col: [out, 1]  ->  [B, out] float32."""
    B, in_size = x.shape
    hidden_size = w1.shape[0]
    out_size = w2.shape[0]

    # Layout plumbing only: put batch on the lane axis for lane-dense
    # loads/stores inside the kernel.
    xt = x.T  # [in, B]

    cost = pl.CostEstimate(
        flops=2 * B * (in_size * hidden_size + hidden_size * out_size),
        transcendentals=0,
        bytes_accessed=(x.nbytes + w1.nbytes + b1_col.nbytes + w2.nbytes
                        + b2_col.nbytes + B * out_size * 4),
    )

    if B <= single_block_max_b:
        # Whole problem is one VMEM-resident block: no grid, no per-step
        # overhead.  (~6 MiB even at B=32768 thanks to sublane-side padding.)
        out_t = pl.pallas_call(
            simple_model_kernel,
            out_shape=jax.ShapeDtypeStruct((out_size, B), jnp.float32),
            cost_estimate=cost,
        )(xt, w1, b1_col, w2, b2_col)
        return out_t.T

    # Large batch: 1-D grid over batch tiles; weights/biases stay resident
    # (constant index_map), x^T / out^T tiles are double-buffered by the
    # BlockSpec pipeline.  Irregular B is padded up to a tile multiple so the
    # tiled path is never abandoned for one giant block.
    assert batch_tile % 128 == 0, "batch_tile must be a multiple of 128 lanes"
    num_tiles = pl.cdiv(B, batch_tile)
    b_padded = num_tiles * batch_tile
    if b_padded != B:
        xt = jnp.pad(xt, ((0, 0), (0, b_padded - B)))

    out_t = pl.pallas_call(
        simple_model_kernel,
        out_shape=jax.ShapeDtypeStruct((out_size, b_padded), jnp.float32),
        grid=(num_tiles,),
        in_specs=[
            pl.BlockSpec((in_size, batch_tile), lambda i: (0, i)),
            pl.BlockSpec((hidden_size, in_size), lambda i: (0, 0)),
            pl.BlockSpec((hidden_size, 1), lambda i: (0, 0)),
            pl.BlockSpec((out_size, hidden_size), lambda i: (0, 0)),
            pl.BlockSpec((out_size, 1), lambda i: (0, 0)),
        ],
        out_specs=pl.BlockSpec((out_size, batch_tile), lambda i: (0, i)),
        compiler_params=pltpu.CompilerParams(
            dimension_semantics=("parallel",)),
        cost_estimate=cost,
    )(xt, w1, b1_col, w2, b2_col)
    return out_t[:, :B].T


def reference_forward(x, w1, b1, w2, b2):
    h = jnp.maximum(x @ w1.T + b1, 0.0)
    return h @ w2.T + b2


if __name__ == "__main__":
    input_size, hidden_size, output_size = 10, 20, 5
    batch = 8

    key = jax.random.PRNGKey(0)
    kx, kw1, kb1, kw2, kb2, kx_big = jax.random.split(key, 6)

    x = jax.random.normal(kx, (batch, input_size), dtype=jnp.float32)

    # Deterministic parameter init (PyTorch nn.Linear-style uniform bounds).
    bound1 = 1.0 / (input_size ** 0.5)
    w1 = jax.random.uniform(kw1, (hidden_size, input_size), jnp.float32,
                            -bound1, bound1)
    b1 = jax.random.uniform(kb1, (hidden_size,), jnp.float32, -bound1, bound1)
    bound2 = 1.0 / (hidden_size ** 0.5)
    w2 = jax.random.uniform(kw2, (output_size, hidden_size), jnp.float32,
                            -bound2, bound2)
    b2 = jax.random.uniform(kb2, (output_size,), jnp.float32, -bound2, bound2)

    # One-time parameter preparation.
    w1_p, b1_col, w2_p, b2_col = prepare_params(w1, b1, w2, b2)

    # --- stated shapes: single-block, gridless path ---
    out = simple_model_forward(x, w1_p, b1_col, w2_p, b2_col)
    out = jax.block_until_ready(out)
    ref = reference_forward(x, w1, b1, w2, b2)
    assert out.shape == (batch, output_size)
    assert jnp.allclose(out, ref, atol=1e-5, rtol=1e-5)

    # --- larger, non-tile-multiple batch: exercises the padded/gridded path ---
    big_batch = 515
    x_big = jax.random.normal(kx_big, (big_batch, input_size), dtype=jnp.float32)
    out_big = simple_model_forward(x_big, w1_p, b1_col, w2_p, b2_col,
                                   batch_tile=256, single_block_max_b=0)
    out_big = jax.block_until_ready(out_big)
    ref_big = reference_forward(x_big, w1, b1, w2, b2)
    assert out_big.shape == (big_batch, output_size)
    assert jnp.allclose(out_big, ref_big, atol=1e-5, rtol=1e-5)

    print("KERNEL_OK")
</pallas_src>

<mosaic_0001>
module attributes {stable_mosaic.version = 11 : i64} {
  func.func @simple_model_kernel(%arg0: memref<10x8xf32, #tpu.memory_space<vmem>>, %arg1: memref<20x10xf32, #tpu.memory_space<vmem>>, %arg2: memref<20x1xf32, #tpu.memory_space<vmem>>, %arg3: memref<5x20xf32, #tpu.memory_space<vmem>>, %arg4: memref<5x1xf32, #tpu.memory_space<vmem>>, %arg5: memref<5x8xf32, #tpu.memory_space<vmem>>) attributes {dimension_semantics = [], scalar_prefetch = 0 : i64, scratch_operands = 0 : i64, tpu.core_type = #tpu.core_type<tc>} {
    %c0 = arith.constant 0 : index
    %c0_0 = arith.constant 0 : index
    %0 = vector.load %arg1[%c0, %c0_0] : memref<20x10xf32, #tpu.memory_space<vmem>>, vector<20x10xf32>
    %c0_1 = arith.constant 0 : index
    %c0_2 = arith.constant 0 : index
    %1 = vector.load %arg0[%c0_1, %c0_2] : memref<10x8xf32, #tpu.memory_space<vmem>>, vector<10x8xf32>
    %cst = arith.constant dense<0.000000e+00> : vector<20x8xf32>
    %2 = tpu.matmul %0, %1, %cst {dimension_numbers = #tpu.dot_dimension_numbers<[1], [0], [0], [1], [0, 0, 1, 1], [], []>} : vector<20x10xf32>, vector<10x8xf32>, vector<20x8xf32> -> vector<20x8xf32>
    %c0_3 = arith.constant 0 : index
    %c0_4 = arith.constant 0 : index
    %3 = vector.load %arg2[%c0_3, %c0_4] : memref<20x1xf32, #tpu.memory_space<vmem>>, vector<20x1xf32>
    %4 = vector.broadcast %3 : vector<20x1xf32> to vector<20x8xf32>
    %5 = arith.addf %2, %4 : vector<20x8xf32>
    %cst_5 = arith.constant 0.000000e+00 : f32
    %6 = vector.broadcast %cst_5 : f32 to vector<20x8xf32>
    %7 = arith.maximumf %5, %6 : vector<20x8xf32>
    %c0_6 = arith.constant 0 : index
    %c0_7 = arith.constant 0 : index
    %8 = vector.load %arg3[%c0_6, %c0_7] : memref<5x20xf32, #tpu.memory_space<vmem>>, vector<5x20xf32>
    %cst_8 = arith.constant dense<0.000000e+00> : vector<5x8xf32>
    %9 = tpu.matmul %8, %7, %cst_8 {dimension_numbers = #tpu.dot_dimension_numbers<[1], [0], [0], [1], [0, 0, 1, 1], [], []>} : vector<5x20xf32>, vector<20x8xf32>, vector<5x8xf32> -> vector<5x8xf32>
    %c0_9 = arith.constant 0 : index
    %c0_10 = arith.constant 0 : index
    %10 = vector.load %arg4[%c0_9, %c0_10] : memref<5x1xf32, #tpu.memory_space<vmem>>, vector<5x1xf32>
    %11 = vector.broadcast %10 : vector<5x1xf32> to vector<5x8xf32>
    %12 = arith.addf %9, %11 : vector<5x8xf32>
    %c0_11 = arith.constant 0 : index
    %c0_12 = arith.constant 0 : index
    %13 = vector.load %arg5[%c0_11, %c0_12] : memref<5x8xf32, #tpu.memory_space<vmem>>, vector<5x8xf32>
    tpu.vector_store %arg5[%c0_11, %c0_12], %12 {strides = array<i32>} : memref<5x8xf32, #tpu.memory_space<vmem>>, vector<5x8xf32>,
    return
  }
}

</mosaic_0001>

<llo_original>
// kernel: tpu_custom_call.1
$region0: #{tpu_custom_call.1}
  #allocation0 [shape = 'u32[]', space=smem, size = 0x4, offset = 0x4, fixed_abs, tag = 'smem constant byte address 0x4 - core index']
  #allocation1 [shape = 'u32[72,128]{1,0:T(1,128)}', space=vmem, size = 0x9000, scoped, tag = 'internal scratch']
  %s0 = inlined_call_operand.vmem [shape: f32[10,8], index: 0, kind: input, shape index: {}]
  %s1 = inlined_call_operand.vmem [shape: f32[20,10], index: 1, kind: input, shape index: {}]
  %s2 = inlined_call_operand.vmem [shape: f32[20,1], index: 2, kind: input, shape index: {}]
  %s3 = inlined_call_operand.vmem [shape: f32[5,20], index: 3, kind: input, shape index: {}]
  %s4 = inlined_call_operand.vmem [shape: f32[5,1], index: 4, kind: input, shape index: {}]
  %s5 = inlined_call_operand.hbm [shape: f32[5,8], index: 5, kind: output, shape index: {}]
  %s6 = sld [smem:[#allocation0]]
  $region30: #{tpu_custom_call.1} parent=0
    _
  %s8 = ssub.s32 1, %s6
  %s9 = scalar_select 0, %s8, %s6
  $region1: #{tpu_custom_call.1} parent=0
    #allocation2 [shape = 'u8[4096]{0}', space=vmem, size = 0x1000, scoped, tag = 'output window, operand 0, single buffered']
    #allocation3 [shape = 's32[1]{0}', space=sflag, size = 0x4, scoped, tag = 'scoped memory for tpu_custom_call.1']
    %10 = vsyncpa [#allocation3], 0
    // Predicated region
    $region2: #{tpu_custom_call.1} parent=1 // pred_check
      _
    $region3: #{tpu_custom_call.1} parent=1 // pred_check_branch
      %12 = sbr.rel (0) target = $region5
    $region4: #{tpu_custom_call.1} parent=1 // pred_region
      _
    $region5: #{tpu_custom_call.1} parent=1 // pred_fallthru
      _
    // Predicated region
    $region6: #{tpu_custom_call.1} parent=1 // pred_check
      _
    $region7: #{tpu_custom_call.1} parent=1 // pred_check_branch
      %14 = sbr.rel (0) target = $region9
    $region8: #{tpu_custom_call.1} parent=1 // pred_region
      _
    $region9: #{tpu_custom_call.1} parent=1 // pred_fallthru
      _
    // Predicated region
    $region10: #{tpu_custom_call.1} parent=1 // pred_check
      _
    $region11: #{tpu_custom_call.1} parent=1 // pred_check_branch
      %16 = sbr.rel (0) target = $region13
    $region12: #{tpu_custom_call.1} parent=1 // pred_region
      _
    $region13: #{tpu_custom_call.1} parent=1 // pred_fallthru
      _
    // Predicated region
    $region14: #{tpu_custom_call.1} parent=1 // pred_check
      _
    $region15: #{tpu_custom_call.1} parent=1 // pred_check_branch
      %18 = sbr.rel (0) target = $region17
    $region16: #{tpu_custom_call.1} parent=1 // pred_region
      _
    $region17: #{tpu_custom_call.1} parent=1 // pred_fallthru
      _
    // Predicated region
    $region18: #{tpu_custom_call.1} parent=1 // pred_check
      _
    $region19: #{tpu_custom_call.1} parent=1 // pred_check_branch
      %20 = sbr.rel (0) target = $region21
    $region20: #{tpu_custom_call.1} parent=1 // pred_region
      _
    $region21: #{tpu_custom_call.1} parent=1 // pred_fallthru
      _
    %v21 = vld [vmem:[%s1] sm:$0xff]
    %v22 = vld [vmem:[%s1 + $0x8] sm:$0xff]
    %v23 = vld [vmem:[%s1 + $0x10] sm:$0xf]
    %v24 = vld [vmem:[%s0] sm:$0xff]
    %v25 = vld [vmem:[%s0 + $0x8] sm:$0x3]
    %v26 = vld [vmem:[%s2] sm:$0xff]
    %v27 = vld [vmem:[%s2 + $0x8] sm:$0xff]
    %v28 = vld [vmem:[%s2 + $0x10] sm:$0xf]
    %30 = vset.pattern.permute.xlu0 0
    %31 = vperm.xlu0 %30, %v26
    %v32 = vpop.permute.xlu0 %31
    %35 = vset.pattern.permute.xlu0 0
    %36 = vperm.xlu0 %35, %v27
    %v37 = vpop.permute.xlu0 %36
    %40 = vset.pattern.permute.xlu0 0
    %41 = vperm.xlu0 %40, %v28
    %v42 = vpop.permute.xlu0 %41
    %vm44 = vcmask 80896
    %v46 = vsel %vm44, %v21, 0
    %v49 = vsel %vm44, %v22, 0
    %v52 = vsel %vm44, %v23, 0
    %vm54 = vcmask 1041408
    %v56 = vsel %vm54, %v25, 0
    %58 = vmatpush.msra.mxu0 0.0
    %59 = vmatpush.msra.mxu0 0.0
    %60 = vmatpush.msra.mxu0 0.0
    %61 = vmatpush.msra.mxu0 0.0
    %62 = vmatpush.msra.mxu0 0.0
    %63 = vmatpush.msra.mxu0 0.0
    %64 = vmatpush.msra.mxu0 0.0
    %65 = vmatpush.msra.mxu0 0.0
    %66 = vmatpush.msra.mxu0 0.0
    %67 = vmatpush.msra.mxu0 0.0
    %68 = vmatpush.msra.mxu0 0.0
    %69 = vmatpush.msra.mxu0 0.0
    %70 = vmatpush.msra.mxu0 0.0
    %71 = vmatpush.msra.mxu0 0.0
    %72 = vmatpush.msra.mxu0 %v56
    %73 = vmatpush.msra.mxu0 %v24
    %74 = vmatmul.f32.gmra.mxu0 %v46
    %v75 = vpop.f32.mrf.mxu0
    %v76 = vadd.f32 %v32, %v75
    %77 = vmatmul.f32.gmra.mxu0 %v49
    %v78 = vpop.f32.mrf.mxu0
    %v79 = vadd.f32 %v37, %v78
    %80 = vmatmul.f32.gmra.mxu0 %v52
    %v81 = vpop.f32.mrf.mxu0
    %v82 = vadd.f32 %v42, %v81
    %83 = vdwg.mxu0
    %v84 = vmax.f32 %v76, 0.0
    %v85 = vmax.f32 %v79, 0.0
    %v86 = vmax.f32 %v82, 0.0
    %v87 = vld [vmem:[%s3] sm:$0x1f]
    %v88 = vld [vmem:[%s4] sm:$0x1f]
    %90 = vset.pattern.permute.xlu0 0
    %91 = vperm.xlu0 %90, %v88
    %v92 = vpop.permute.xlu0 %91
    %vm94 = vcmask 162816
    %v96 = vsel %vm94, %v87, 0
    %vm98 = vcmask 1043456
    %v100 = vsel %vm98, %v86, 0
    %102 = vmatpush.msra.mxu0 0.0
    %103 = vmatpush.msra.mxu0 0.0
    %104 = vmatpush.msra.mxu0 0.0
    %105 = vmatpush.msra.mxu0 0.0
    %106 = vmatpush.msra.mxu0 0.0
    %107 = vmatpush.msra.mxu0 0.0
    %108 = vmatpush.msra.mxu0 0.0
    %109 = vmatpush.msra.mxu0 0.0
    %110 = vmatpush.msra.mxu0 0.0
    %111 = vmatpush.msra.mxu0 0.0
    %112 = vmatpush.msra.mxu0 0.0
    %113 = vmatpush.msra.mxu0 0.0
    %114 = vmatpush.msra.mxu0 0.0
    %115 = vmatpush.msra.mxu0 %v100
    %116 = vmatpush.msra.mxu0 %v85
    %117 = vmatpush.msra.mxu0 %v84
    %118 = vmatmul.f32.gmra.mxu0 %v96
    %v119 = vpop.f32.mrf.mxu0
    %v120 = vadd.f32 %v92, %v119
    %121 = vdwg.mxu0
    %vm122 = vcmask 61440
    %123 = vst.msk [vmem:[#allocation2] sm:$0x1f] %vm122, %v120
    // Predicated region
    $region22: #{tpu_custom_call.1} parent=1 // pred_check
      _
    $region23: #{tpu_custom_call.1} parent=1 // pred_check_branch
      %125 = sbr.rel (0) target = $region25
    $region24: #{tpu_custom_call.1} parent=1 // pred_region
      %127 = vsyncadd [#allocation3], 0
      %s129 = sshll.u32 [#allocation2], 4
      %s130 = int_to_ptr.vmem [resolvable:$true] %s129
      %s131 = sshll.u32 %s5, 4
      %s132 = int_to_ptr.hbm [resolvable:$true] %s131
      %134 = dma.vmem_to_hbm [thread:$0]  %s130, 128, %s132, [#allocation3]
    $region25: #{tpu_custom_call.1} parent=1 // pred_fallthru
      _
    // Predicated region
    $region26: #{tpu_custom_call.1} parent=1 // pred_check
      _
    $region27: #{tpu_custom_call.1} parent=1 // pred_check_branch
      %136 = sbr.rel (0) target = $region29
    $region28: #{tpu_custom_call.1} parent=1 // pred_region
      %138 = dma.done [#allocation3], 128
    $region29: #{tpu_custom_call.1} parent=1 // pred_fallthru
      _
    %139 = vsyncpa [#allocation3], 1

</llo_original>
